<compile_context>
chip_gen: v5e
topology: v5e:2x2
jax: 0.10.0
libtpu: 0.0.40
codegen_flags: <defaults>
</compile_context>

<pallas_src>
import math

import jax
import jax.numpy as jnp
from jax.experimental import pallas as pl
from jax.experimental.pallas import tpu as pltpu

_BN_EPS = 1e-5
_MXU_DTYPE = jnp.bfloat16  # MXU operand dtype; accumulation is always f32.


def _conv_stats_kernel(x_ref, b_ref, conv_ref, sum_ref, ssq_ref):
    """Pass 1: circular 3x3 conv for one batch element + BN partial stats.

    x_ref   : (1, H, W*Cin)        input slab, (W, Cin) flattened into lanes
    b_ref   : (3, W*Cin, W*Cout)   block-circulant weights (one per kh tap)
    conv_ref: (1, H, W*Cout)       f32 pre-BN conv output
    sum_ref : (1, 1, W*Cout)       per-(w, cout) partial sum
    ssq_ref : (1, 1, W*Cout)       per-(w, cout) partial sum of squares
    """
    x0 = x_ref[0]                              # (H, W*Cin) f32
    h = x0.shape[0]
    wcout = conv_ref.shape[-1]

    acc = jnp.zeros((h, wcout), dtype=jnp.float32)
    # kh in {0,1,2} -> row offset dh = kh-1; circular wrap along H is a small
    # sublane rotation (explicit concat of two static slices; pltpu.roll is
    # the equivalent XLU primitive).  W wrap is baked into b_ref.
    for kh in range(3):
        if kh == 0:        # tap[h] = x[(h - 1) % H]
            xh = jnp.concatenate([x0[-1:], x0[:-1]], axis=0)
        elif kh == 2:      # tap[h] = x[(h + 1) % H]
            xh = jnp.concatenate([x0[1:], x0[:1]], axis=0)
        else:
            xh = x0
        acc = acc + jnp.dot(
            xh.astype(_MXU_DTYPE),
            b_ref[kh].astype(_MXU_DTYPE),
            preferred_element_type=jnp.float32,
        )

    conv_ref[0] = acc
    # Fused BatchNorm partial statistics (per (w, cout) lane; the wrapper
    # folds the W groups and the batch axis — a tiny reduction).
    sum_ref[0] = jnp.sum(acc, axis=0, keepdims=True)
    ssq_ref[0] = jnp.sum(acc * acc, axis=0, keepdims=True)


def _bn_relu_kernel(conv_ref, scale_ref, shift_ref, o_ref):
    """Pass 2: y = relu(conv * scale + shift); fully lane-dense elementwise."""
    y = conv_ref[...] * scale_ref[...] + shift_ref[...]
    o_ref[...] = jnp.maximum(y, 0.0).astype(o_ref.dtype)


def _build_circulant_weights(weight_oihw, width):
    """OIHW (Cout, Cin, 3, 3) -> (3, W*Cin, W*Cout) block-circulant matrices.

    B[kh, wp*Cin + c, w*Cout + d] = sum_kw [wp == (w + kw - 1) % W] * W[d, c, kh, kw]
    so that   conv[h, w*Cout + d] = sum_kh  x[(h + kh - 1) % H, :] @ B[kh]
    realizes the 3x3 circular convolution with (W, C) flattened into lanes.
    """
    cout, cin, _, _ = weight_oihw.shape
    w_hwio = jnp.transpose(weight_oihw, (2, 3, 1, 0))            # (3, 3, Cin, Cout)
    ids = jnp.arange(width)
    shift = jnp.stack(
        [(ids[:, None] == ((ids[None, :] + kw - 1) % width)).astype(w_hwio.dtype)
         for kw in range(3)])                                    # (3, W, W)
    b = jnp.einsum("spw,kscd->kpcwd", shift, w_hwio)             # (3, W, Cin, W, Cout)
    return b.reshape(3, width * cin, width * cout)


def conv_layer_forward(x_nchw, weight_oihw, bias, gamma, beta):
    """Equivalent of ConvLayer.forward(x) for NCHW input x."""
    # Training-mode BatchNorm subtracts the per-channel batch mean, which
    # cancels the conv bias exactly -> no bias add in the kernel.
    del bias
    n, cin, h, w = x_nchw.shape
    cout = weight_oihw.shape[0]
    wcin, wcout = w * cin, w * cout

    # Interface glue (module contract is NCHW): NCHW -> NHWC -> (N, H, W*Cin).
    x_slab = jnp.transpose(x_nchw, (0, 2, 3, 1)).reshape(n, h, wcin)
    b_circ = _build_circulant_weights(weight_oihw, w).astype(_MXU_DTYPE)

    comp_params = pltpu.CompilerParams(
        dimension_semantics=("parallel",),       # batch axis across TCs (v7x)
        vmem_limit_bytes=32 * 1024 * 1024,       # well inside v7x's 64 MiB VMEM
    )

    # ---- Pass 1: conv + partial BN stats -------------------------------
    conv_cost = pl.CostEstimate(
        flops=2 * 3 * n * h * wcin * wcout,
        transcendentals=0,
        bytes_accessed=(x_slab.size * 4 + b_circ.size * 2
                        + n * h * wcout * 4 + 2 * n * wcout * 4),
    )
    conv_out, part_sum, part_ssq = pl.pallas_call(
        _conv_stats_kernel,
        grid=(n,),
        in_specs=[
            pl.BlockSpec((1, h, wcin), lambda i: (i, 0, 0)),
            pl.BlockSpec((3, wcin, wcout), lambda i: (0, 0, 0)),
        ],
        out_specs=[
            pl.BlockSpec((1, h, wcout), lambda i: (i, 0, 0)),
            pl.BlockSpec((1, 1, wcout), lambda i: (i, 0, 0)),
            pl.BlockSpec((1, 1, wcout), lambda i: (i, 0, 0)),
        ],
        out_shape=[
            jax.ShapeDtypeStruct((n, h, wcout), jnp.float32),
            jax.ShapeDtypeStruct((n, 1, wcout), jnp.float32),
            jax.ShapeDtypeStruct((n, 1, wcout), jnp.float32),
        ],
        compiler_params=comp_params,
        cost_estimate=conv_cost,
    )(x_slab, b_circ)

    # ---- Fold partial stats (tiny, plain JAX) --------------------------
    count = float(n * h * w)
    ch_sum = part_sum.sum(axis=(0, 1)).reshape(w, cout).sum(axis=0)   # (Cout,)
    ch_ssq = part_ssq.sum(axis=(0, 1)).reshape(w, cout).sum(axis=0)
    mean = ch_sum / count
    var = jnp.maximum(ch_ssq / count - mean * mean, 0.0)              # biased (BN training)
    inv_std = jax.lax.rsqrt(var + _BN_EPS)
    scale_c = gamma.astype(jnp.float32) * inv_std
    shift_c = beta.astype(jnp.float32) - mean * scale_c
    scale_row = jnp.tile(scale_c, w).reshape(1, wcout)                # lane = w*Cout + d
    shift_row = jnp.tile(shift_c, w).reshape(1, wcout)

    # ---- Pass 2: normalize + ReLU --------------------------------------
    out_slab = pl.pallas_call(
        _bn_relu_kernel,
        grid=(n,),
        in_specs=[
            pl.BlockSpec((1, h, wcout), lambda i: (i, 0, 0)),
            pl.BlockSpec((1, wcout), lambda i: (0, 0)),
            pl.BlockSpec((1, wcout), lambda i: (0, 0)),
        ],
        out_specs=pl.BlockSpec((1, h, wcout), lambda i: (i, 0, 0)),
        out_shape=jax.ShapeDtypeStruct((n, h, wcout), x_nchw.dtype),
        compiler_params=comp_params,
        cost_estimate=pl.CostEstimate(
            flops=3 * n * h * wcout,
            transcendentals=0,
            bytes_accessed=2 * n * h * wcout * 4 + 2 * wcout * 4),
    )(conv_out, scale_row, shift_row)

    # (N, H, W*Cout) -> (N, H, W, Cout) -> NCHW.
    return jnp.transpose(out_slab.reshape(n, h, w, cout), (0, 3, 1, 2))


def init_params(key, in_channels, out_channels):
    """Deterministic parameter init matching the PyTorch module's __init__."""
    k_w, k_b = jax.random.split(key, 2)
    fan_in = in_channels * 3 * 3
    fan_out = out_channels * 3 * 3
    xav_bound = math.sqrt(6.0 / (fan_in + fan_out))       # xavier_uniform_
    weight = jax.random.uniform(
        k_w, (out_channels, in_channels, 3, 3),
        minval=-xav_bound, maxval=xav_bound, dtype=jnp.float32)
    b_bound = 1.0 / math.sqrt(fan_in)                      # PyTorch Conv2d bias default
    bias = jax.random.uniform(
        k_b, (out_channels,), minval=-b_bound, maxval=b_bound, dtype=jnp.float32)
    gamma = jnp.ones((out_channels,), jnp.float32)         # BatchNorm2d defaults
    beta = jnp.zeros((out_channels,), jnp.float32)
    return weight, bias, gamma, beta


def _reference_forward(x, weight, bias, gamma, beta):
    """Plain-JAX f32 reference of the PyTorch module (for a sanity check)."""
    xp = jnp.pad(x, ((0, 0), (0, 0), (1, 1), (1, 1)), mode="wrap")
    conv = jax.lax.conv_general_dilated(
        xp, weight, window_strides=(1, 1), padding="VALID",
        dimension_numbers=("NCHW", "OIHW", "NCHW"))
    conv = conv + bias[None, :, None, None]
    mean = conv.mean(axis=(0, 2, 3), keepdims=True)
    var = conv.var(axis=(0, 2, 3), keepdims=True)          # biased, training-mode BN
    y = (conv - mean) * jax.lax.rsqrt(var + _BN_EPS)
    y = y * gamma[None, :, None, None] + beta[None, :, None, None]
    return jnp.maximum(y, 0.0)


if __name__ == "__main__":
    key = jax.random.PRNGKey(0)
    k_x, k_p = jax.random.split(key)

    in_channels, out_channels = 4, 8
    n, h, w = 2, 16, 16

    x = jax.random.normal(k_x, (n, in_channels, h, w), dtype=jnp.float32)
    weight, bias, gamma, beta = init_params(k_p, in_channels, out_channels)

    fwd = jax.jit(conv_layer_forward)
    out = jax.block_until_ready(fwd(x, weight, bias, gamma, beta))

    assert out.shape == (n, out_channels, h, w)
    assert bool(jnp.all(out >= 0.0))                       # ReLU output non-negative

    ref = _reference_forward(x, weight, bias, gamma, beta)
    max_err = float(jnp.max(jnp.abs(out - ref)))
    assert max_err < 1e-1, f"max abs error vs reference: {max_err}"
    print("KERNEL_OK")
</pallas_src>

<mosaic_0001>
module attributes {stable_mosaic.version = 11 : i64} {
  func.func @_conv_stats_kernel(%arg0: i32, %arg1: memref<1x16x64xf32, #tpu.memory_space<vmem>>, %arg2: memref<3x64x128xbf16, #tpu.memory_space<vmem>>, %arg3: memref<1x16x128xf32, #tpu.memory_space<vmem>>, %arg4: memref<1x1x128xf32, #tpu.memory_space<vmem>>, %arg5: memref<1x1x128xf32, #tpu.memory_space<vmem>>) attributes {dimension_semantics = [#tpu.dimension_semantics<parallel>], iteration_bounds = array<i64: 2>, scalar_prefetch = 0 : i64, scratch_operands = 0 : i64, tpu.core_type = #tpu.core_type<tc>, window_params = [{transform_indices = @transform_0, window_bounds = array<i64: 1, 16, 64>}, {pipeline_mode = #tpu.pipeline_mode<synchronous>, transform_indices = @transform_1, window_bounds = array<i64: 3, 64, 128>}, {transform_indices = @transform_2, window_bounds = array<i64: 1, 16, 128>}, {transform_indices = @transform_3, window_bounds = array<i64: 1, 1, 128>}, {transform_indices = @transform_4, window_bounds = array<i64: 1, 1, 128>}]} {
    %c0 = arith.constant 0 : index
    %c0_0 = arith.constant 0 : index
    %c0_1 = arith.constant 0 : index
    %0 = vector.load %arg1[%c0, %c0_0, %c0_1] : memref<1x16x64xf32, #tpu.memory_space<vmem>>, vector<1x16x64xf32>
    %1 = vector.shape_cast %0 : vector<1x16x64xf32> to vector<16x64xf32>
    %cst = arith.constant 0.000000e+00 : f32
    %2 = vector.broadcast %cst : f32 to vector<16x128xf32>
    %3 = vector.extract_strided_slice %1 {offsets = [15, 0], sizes = [1, 64], strides = [1, 1]} : vector<16x64xf32> to vector<1x64xf32>
    %4 = vector.extract_strided_slice %1 {offsets = [0, 0], sizes = [15, 64], strides = [1, 1]} : vector<16x64xf32> to vector<15x64xf32>
    %5 = tpu.concatenate %3, %4 in 0 : vector<1x64xf32>, vector<15x64xf32> -> vector<16x64xf32>
    %6 = arith.truncf %5 : vector<16x64xf32> to vector<16x64xbf16>
    %c0_2 = arith.constant 0 : index
    %c0_3 = arith.constant 0 : index
    %c0_4 = arith.constant 0 : index
    %7 = vector.load %arg2[%c0_2, %c0_3, %c0_4] : memref<3x64x128xbf16, #tpu.memory_space<vmem>>, vector<1x64x128xbf16>
    %8 = vector.shape_cast %7 : vector<1x64x128xbf16> to vector<64x128xbf16>
    %cst_5 = arith.constant dense<0.000000e+00> : vector<16x128xf32>
    %9 = tpu.matmul %6, %8, %cst_5 {dimension_numbers = #tpu.dot_dimension_numbers<[1], [0], [0], [1], [0, 0, 1, 1], [], []>} : vector<16x64xbf16>, vector<64x128xbf16>, vector<16x128xf32> -> vector<16x128xf32>
    %10 = arith.addf %2, %9 : vector<16x128xf32>
    %11 = arith.truncf %1 : vector<16x64xf32> to vector<16x64xbf16>
    %c1 = arith.constant 1 : index
    %c0_6 = arith.constant 0 : index
    %c0_7 = arith.constant 0 : index
    %12 = vector.load %arg2[%c1, %c0_6, %c0_7] : memref<3x64x128xbf16, #tpu.memory_space<vmem>>, vector<1x64x128xbf16>
    %13 = vector.shape_cast %12 : vector<1x64x128xbf16> to vector<64x128xbf16>
    %cst_8 = arith.constant dense<0.000000e+00> : vector<16x128xf32>
    %14 = tpu.matmul %11, %13, %cst_8 {dimension_numbers = #tpu.dot_dimension_numbers<[1], [0], [0], [1], [0, 0, 1, 1], [], []>} : vector<16x64xbf16>, vector<64x128xbf16>, vector<16x128xf32> -> vector<16x128xf32>
    %15 = arith.addf %10, %14 : vector<16x128xf32>
    %16 = vector.extract_strided_slice %1 {offsets = [1, 0], sizes = [15, 64], strides = [1, 1]} : vector<16x64xf32> to vector<15x64xf32>
    %17 = vector.extract_strided_slice %1 {offsets = [0, 0], sizes = [1, 64], strides = [1, 1]} : vector<16x64xf32> to vector<1x64xf32>
    %18 = tpu.concatenate %16, %17 in 0 : vector<15x64xf32>, vector<1x64xf32> -> vector<16x64xf32>
    %19 = arith.truncf %18 : vector<16x64xf32> to vector<16x64xbf16>
    %c2 = arith.constant 2 : index
    %c0_9 = arith.constant 0 : index
    %c0_10 = arith.constant 0 : index
    %20 = vector.load %arg2[%c2, %c0_9, %c0_10] : memref<3x64x128xbf16, #tpu.memory_space<vmem>>, vector<1x64x128xbf16>
    %21 = vector.shape_cast %20 : vector<1x64x128xbf16> to vector<64x128xbf16>
    %cst_11 = arith.constant dense<0.000000e+00> : vector<16x128xf32>
    %22 = tpu.matmul %19, %21, %cst_11 {dimension_numbers = #tpu.dot_dimension_numbers<[1], [0], [0], [1], [0, 0, 1, 1], [], []>} : vector<16x64xbf16>, vector<64x128xbf16>, vector<16x128xf32> -> vector<16x128xf32>
    %23 = arith.addf %15, %22 : vector<16x128xf32>
    %c0_12 = arith.constant 0 : index
    %c0_13 = arith.constant 0 : index
    %c0_14 = arith.constant 0 : index
    %24 = vector.load %arg3[%c0_12, %c0_13, %c0_14] : memref<1x16x128xf32, #tpu.memory_space<vmem>>, vector<1x16x128xf32>
    %25 = vector.shape_cast %24 : vector<1x16x128xf32> to vector<16x128xf32>
    %26 = vector.shape_cast %23 : vector<16x128xf32> to vector<1x16x128xf32>
    tpu.vector_store %arg3[%c0_12, %c0_13, %c0_14], %26 {strides = array<i32>} : memref<1x16x128xf32, #tpu.memory_space<vmem>>, vector<1x16x128xf32>,
    %cst_15 = arith.constant dense<0.000000e+00> : vector<128xf32>
    %27 = vector.multi_reduction <add>, %23, %cst_15 [0] : vector<16x128xf32> to vector<128xf32>
    %28 = vector.shape_cast %27 : vector<128xf32> to vector<1x128xf32>
    %c0_16 = arith.constant 0 : index
    %c0_17 = arith.constant 0 : index
    %c0_18 = arith.constant 0 : index
    %29 = vector.load %arg4[%c0_16, %c0_17, %c0_18] : memref<1x1x128xf32, #tpu.memory_space<vmem>>, vector<1x1x128xf32>
    %30 = vector.shape_cast %29 : vector<1x1x128xf32> to vector<1x128xf32>
    %31 = vector.shape_cast %28 : vector<1x128xf32> to vector<1x1x128xf32>
    tpu.vector_store %arg4[%c0_16, %c0_17, %c0_18], %31 {strides = array<i32>} : memref<1x1x128xf32, #tpu.memory_space<vmem>>, vector<1x1x128xf32>,
    %32 = arith.mulf %23, %23 : vector<16x128xf32>
    %cst_19 = arith.constant dense<0.000000e+00> : vector<128xf32>
    %33 = vector.multi_reduction <add>, %32, %cst_19 [0] : vector<16x128xf32> to vector<128xf32>
    %34 = vector.shape_cast %33 : vector<128xf32> to vector<1x128xf32>
    %c0_20 = arith.constant 0 : index
    %c0_21 = arith.constant 0 : index
    %c0_22 = arith.constant 0 : index
    %35 = vector.load %arg5[%c0_20, %c0_21, %c0_22] : memref<1x1x128xf32, #tpu.memory_space<vmem>>, vector<1x1x128xf32>
    %36 = vector.shape_cast %35 : vector<1x1x128xf32> to vector<1x128xf32>
    %37 = vector.shape_cast %34 : vector<1x128xf32> to vector<1x1x128xf32>
    tpu.vector_store %arg5[%c0_20, %c0_21, %c0_22], %37 {strides = array<i32>} : memref<1x1x128xf32, #tpu.memory_space<vmem>>, vector<1x1x128xf32>,
    return
  }
  func.func @transform_0(%arg0: i32) -> (i32, i32, i32) {
    %c0_i32 = arith.constant 0 : i32
    %c0_i32_0 = arith.constant 0 : i32
    %c0_i32_1 = arith.constant 0 : i32
    return %arg0, %c0_i32, %c0_i32_0 : i32, i32, i32
  }
  func.func @transform_1(%arg0: i32) -> (i32, i32, i32) {
    %c0_i32 = arith.constant 0 : i32
    %c0_i32_0 = arith.constant 0 : i32
    %c0_i32_1 = arith.constant 0 : i32
    %c0_i32_2 = arith.constant 0 : i32
    return %c0_i32, %c0_i32_0, %c0_i32_1 : i32, i32, i32
  }
  func.func @transform_2(%arg0: i32) -> (i32, i32, i32) {
    %c0_i32 = arith.constant 0 : i32
    %c0_i32_0 = arith.constant 0 : i32
    %c0_i32_1 = arith.constant 0 : i32
    return %arg0, %c0_i32, %c0_i32_0 : i32, i32, i32
  }
  func.func @transform_3(%arg0: i32) -> (i32, i32, i32) {
    %c0_i32 = arith.constant 0 : i32
    %c0_i32_0 = arith.constant 0 : i32
    %c0_i32_1 = arith.constant 0 : i32
    return %arg0, %c0_i32, %c0_i32_0 : i32, i32, i32
  }
  func.func @transform_4(%arg0: i32) -> (i32, i32, i32) {
    %c0_i32 = arith.constant 0 : i32
    %c0_i32_0 = arith.constant 0 : i32
    %c0_i32_1 = arith.constant 0 : i32
    return %arg0, %c0_i32, %c0_i32_0 : i32, i32, i32
  }
}

module attributes {stable_mosaic.version = 11 : i64} {
  func.func @_bn_relu_kernel(%arg0: i32, %arg1: memref<1x16x128xf32, #tpu.memory_space<vmem>>, %arg2: memref<1x128xf32, #tpu.memory_space<vmem>>, %arg3: memref<1x128xf32, #tpu.memory_space<vmem>>, %arg4: memref<1x16x128xf32, #tpu.memory_space<vmem>>) attributes {dimension_semantics = [#tpu.dimension_semantics<parallel>], iteration_bounds = array<i64: 2>, scalar_prefetch = 0 : i64, scratch_operands = 0 : i64, tpu.core_type = #tpu.core_type<tc>, window_params = [{transform_indices = @transform_0, window_bounds = array<i64: 1, 16, 128>}, {pipeline_mode = #tpu.pipeline_mode<synchronous>, transform_indices = @transform_1, window_bounds = array<i64: 1, 128>}, {pipeline_mode = #tpu.pipeline_mode<synchronous>, transform_indices = @transform_2, window_bounds = array<i64: 1, 128>}, {transform_indices = @transform_3, window_bounds = array<i64: 1, 16, 128>}]} {
    %c0 = arith.constant 0 : index
    %c0_0 = arith.constant 0 : index
    %c0_1 = arith.constant 0 : index
    %0 = vector.load %arg1[%c0, %c0_0, %c0_1] : memref<1x16x128xf32, #tpu.memory_space<vmem>>, vector<1x16x128xf32>
    %c0_2 = arith.constant 0 : index
    %c0_3 = arith.constant 0 : index
    %1 = vector.load %arg2[%c0_2, %c0_3] : memref<1x128xf32, #tpu.memory_space<vmem>>, vector<1x128xf32>
    %2 = vector.shape_cast %1 : vector<1x128xf32> to vector<1x1x128xf32>
    %3 = vector.broadcast %2 : vector<1x1x128xf32> to vector<1x16x128xf32>
    %4 = arith.mulf %0, %3 : vector<1x16x128xf32>
    %c0_4 = arith.constant 0 : index
    %c0_5 = arith.constant 0 : index
    %5 = vector.load %arg3[%c0_4, %c0_5] : memref<1x128xf32, #tpu.memory_space<vmem>>, vector<1x128xf32>
    %6 = vector.shape_cast %5 : vector<1x128xf32> to vector<1x1x128xf32>
    %7 = vector.broadcast %6 : vector<1x1x128xf32> to vector<1x16x128xf32>
    %8 = arith.addf %4, %7 : vector<1x16x128xf32>
    %cst = arith.constant 0.000000e+00 : f32
    %9 = vector.broadcast %cst : f32 to vector<1x16x128xf32>
    %10 = arith.maximumf %8, %9 : vector<1x16x128xf32>
    %c0_6 = arith.constant 0 : index
    %c0_7 = arith.constant 0 : index
    %c0_8 = arith.constant 0 : index
    %11 = vector.load %arg4[%c0_6, %c0_7, %c0_8] : memref<1x16x128xf32, #tpu.memory_space<vmem>>, vector<1x16x128xf32>
    tpu.vector_store %arg4[%c0_6, %c0_7, %c0_8], %10 {strides = array<i32>} : memref<1x16x128xf32, #tpu.memory_space<vmem>>, vector<1x16x128xf32>,
    return
  }
  func.func @transform_0(%arg0: i32) -> (i32, i32, i32) {
    %c0_i32 = arith.constant 0 : i32
    %c0_i32_0 = arith.constant 0 : i32
    %c0_i32_1 = arith.constant 0 : i32
    return %arg0, %c0_i32, %c0_i32_0 : i32, i32, i32
  }
  func.func @transform_1(%arg0: i32) -> (i32, i32) {
    %c0_i32 = arith.constant 0 : i32
    %c0_i32_0 = arith.constant 0 : i32
    %c0_i32_1 = arith.constant 0 : i32
    return %c0_i32, %c0_i32_0 : i32, i32
  }
  func.func @transform_2(%arg0: i32) -> (i32, i32) {
    %c0_i32 = arith.constant 0 : i32
    %c0_i32_0 = arith.constant 0 : i32
    %c0_i32_1 = arith.constant 0 : i32
    return %c0_i32, %c0_i32_0 : i32, i32
  }
  func.func @transform_3(%arg0: i32) -> (i32, i32, i32) {
    %c0_i32 = arith.constant 0 : i32
    %c0_i32_0 = arith.constant 0 : i32
    %c0_i32_1 = arith.constant 0 : i32
    return %arg0, %c0_i32, %c0_i32_0 : i32, i32, i32
  }
}

</mosaic_0001>

<llo_original>
// kernel: conv_layer_forward.2
$region0: #{conv_layer_forward.2}
  #allocation0 [shape = 'u32[]', space=smem, size = 0x4, offset = 0x4, fixed_abs, tag = 'smem constant byte address 0x4 - core index']
  #allocation1 [shape = 'u32[72,128]{1,0:T(1,128)}', space=vmem, size = 0x9000, scoped, tag = 'internal scratch']
  %s0 = inlined_call_operand.vmem [shape: f32[2,16,64], index: 0, kind: input, shape index: {}]
  %s1 = inlined_call_operand.vmem [shape: bf16[3,64,128], index: 1, kind: input, shape index: {}]
  %s2 = inlined_call_operand.vmem [shape: f32[2,16,128], index: 2, kind: output, shape index: {0}]
  %s3 = inlined_call_operand.vmem [shape: f32[2,1,128], index: 3, kind: output, shape index: {1}]
  %s4 = inlined_call_operand.vmem [shape: f32[2,1,128], index: 4, kind: output, shape index: {2}]
  %5 = xla_tuple %s2, %s3, %s4
  %s6 = sld [smem:[#allocation0]]
  $region57: #{conv_layer_forward.2} parent=0
    _
  %s8 = ssub.s32 1, %s6
  %s9 = scalar_select 0, %s8, %s6
  loop: start=0, step=1, limit=4
  $region2: #{conv_layer_forward.2} parent=0 // loop_pre_header
    _
  $region3: #{conv_layer_forward.2} parent=0 // loop_header
    %s11 = sphi 0, %s15
    %p12 = scmp.ge.s32.totalorder %s11, 4
    %s21 = sphi 0, %s23
    %s24 = sphi 0, %s21
    %s25 = sphi 0, %s24
    %s41 = sphi 0, %s25
    %s45 = sphi 0, %s45
    %s47 = sphi 0, %s45
    %s48 = sphi 0, %s47
    %s62 = sphi 0, %s48
    %s68 = sphi 0, %s70
    %s71 = sphi 0, %s68
    %s72 = sphi 0, %s71
    %s88 = sphi 0, %s72
    %s94 = sphi 0, %s96
    %s97 = sphi 0, %s94
    %s98 = sphi 0, %s97
    %s114 = sphi 0, %s98
    %s120 = sphi 0, %s122
    %s123 = sphi 0, %s120
    %s124 = sphi 0, %s123
    %s140 = sphi 0, %s124
  $region4: #{conv_layer_forward.2} parent=0 // loop_header_branch
    %14 = sbr.rel (%p12) target = $region8
  $region5: #{conv_layer_forward.2} parent=0 // loop_body
    %s16 = ssub.s32 %s11, 1
    %s17 = ssub.s32 %s11, 2
    %s18 = sadd.s32 %s11, 1
    %s19 = ssub.s32 %s11, %s18
    %p20 = scmp.eq.s32.totalorder %s19, 0
    %s22 = sadd.s32 %s21, 1
    %s23 = scalar_select %p20, %s21, %s22
    %p26 = pneg %p20
    %p27 = scmp.eq.s32.totalorder %s11, 1
    %p28 = por %p26, %p27
    %p29 = scmp.ne.s32.totalorder %s21, %s24
    %p30 = scmp.eq.s32.totalorder %s11, 0
    %p31 = por %p29, %p30
    %p32 = scmp.ne.s32.totalorder %s21, %s24
    %p33 = scmp.eq.s32.totalorder %s16, 1
    %p34 = por %p32, %p33
    %p35 = scmp.ne.s32.totalorder %s24, %s25
    %p36 = scmp.eq.s32.totalorder %s16, 0
    %p37 = por %p35, %p36
    %p38 = scmp.ne.s32.totalorder %s24, %s25
    %p39 = scmp.eq.s32.totalorder %s17, 1
    %p40 = por %p38, %p39
    %p42 = scmp.ne.s32.totalorder %s25, %s41
    %p43 = scmp.eq.s32.totalorder %s17, 0
    %p44 = por %p42, %p43
    %s46 = sadd.s32 %s45, 1
    %p49 = scmp.eq.s32.totalorder %s11, 1
    %p50 = scmp.ne.s32.totalorder %s45, %s47
    %p51 = scmp.eq.s32.totalorder %s11, 0
    %p52 = por %p50, %p51
    %p53 = scmp.ne.s32.totalorder %s45, %s47
    %p54 = scmp.eq.s32.totalorder %s16, 1
    %p55 = por %p53, %p54
    %p56 = scmp.ne.s32.totalorder %s47, %s48
    %p57 = scmp.eq.s32.totalorder %s16, 0
    %p58 = por %p56, %p57
    %p59 = scmp.ne.s32.totalorder %s47, %s48
    %p60 = scmp.eq.s32.totalorder %s17, 1
    %p61 = por %p59, %p60
    %p63 = scmp.ne.s32.totalorder %s48, %s62
    %p64 = scmp.eq.s32.totalorder %s17, 0
    %p65 = por %p63, %p64
    %s66 = ssub.s32 %s11, %s18
    %p67 = scmp.eq.s32.totalorder %s66, 0
    %s69 = sadd.s32 %s68, 1
    %s70 = scalar_select %p67, %s68, %s69
    %p73 = pneg %p67
    %p74 = scmp.eq.s32.totalorder %s11, 1
    %p75 = por %p73, %p74
    %p76 = scmp.ne.s32.totalorder %s68, %s71
    %p77 = scmp.eq.s32.totalorder %s11, 0
    %p78 = por %p76, %p77
    %p79 = scmp.ne.s32.totalorder %s68, %s71
    %p80 = scmp.eq.s32.totalorder %s16, 1
    %p81 = por %p79, %p80
    %p82 = scmp.ne.s32.totalorder %s71, %s72
    %p83 = scmp.eq.s32.totalorder %s16, 0
    %p84 = por %p82, %p83
    %p85 = scmp.ne.s32.totalorder %s71, %s72
    %p86 = scmp.eq.s32.totalorder %s17, 1
    %p87 = por %p85, %p86
    %p89 = scmp.ne.s32.totalorder %s72, %s88
    %p90 = scmp.eq.s32.totalorder %s17, 0
    %p91 = por %p89, %p90
    %s92 = ssub.s32 %s11, %s18
    %p93 = scmp.eq.s32.totalorder %s92, 0
    %s95 = sadd.s32 %s94, 1
    %s96 = scalar_select %p93, %s94, %s95
    %p99 = pneg %p93
    %p100 = scmp.eq.s32.totalorder %s11, 1
    %p101 = por %p99, %p100
    %p102 = scmp.ne.s32.totalorder %s94, %s97
    %p103 = scmp.eq.s32.totalorder %s11, 0
    %p104 = por %p102, %p103
    %p105 = scmp.ne.s32.totalorder %s94, %s97
    %p106 = scmp.eq.s32.totalorder %s16, 1
    %p107 = por %p105, %p106
    %p108 = scmp.ne.s32.totalorder %s97, %s98
    %p109 = scmp.eq.s32.totalorder %s16, 0
    %p110 = por %p108, %p109
    %p111 = scmp.ne.s32.totalorder %s97, %s98
    %p112 = scmp.eq.s32.totalorder %s17, 1
    %p113 = por %p111, %p112
    %p115 = scmp.ne.s32.totalorder %s98, %s114
    %p116 = scmp.eq.s32.totalorder %s17, 0
    %p117 = por %p115, %p116
    %s118 = ssub.s32 %s11, %s18
    %p119 = scmp.eq.s32.totalorder %s118, 0
    %s121 = sadd.s32 %s120, 1
    %s122 = scalar_select %p119, %s120, %s121
    %p125 = pneg %p119
    %p126 = scmp.eq.s32.totalorder %s11, 1
    %p127 = por %p125, %p126
    %p128 = scmp.ne.s32.totalorder %s120, %s123
    %p129 = scmp.eq.s32.totalorder %s11, 0
    %p130 = por %p128, %p129
    %p131 = scmp.ne.s32.totalorder %s120, %s123
    %p132 = scmp.eq.s32.totalorder %s16, 1
    %p133 = por %p131, %p132
    %p134 = scmp.ne.s32.totalorder %s123, %s124
    %p135 = scmp.eq.s32.totalorder %s16, 0
    %p136 = por %p134, %p135
    %p137 = scmp.ne.s32.totalorder %s123, %s124
    %p138 = scmp.eq.s32.totalorder %s17, 1
    %p139 = por %p137, %p138
    %p141 = scmp.ne.s32.totalorder %s124, %s140
    %p142 = scmp.eq.s32.totalorder %s17, 0
    %p143 = por %p141, %p142
    %p144 = scmp.le.s32.totalorder 1, %s11
    %p145 = scmp.lt.s32.totalorder %s11, 3
    %p146 = pnand %p144, %p145
    %p147 = pneg %p146
    // Predicated region
    $region9: #{conv_layer_forward.2} parent=5 // pred_check
      _
    $region10: #{conv_layer_forward.2} parent=5 // pred_check_branch
      %149 = sbr.rel (%p146) target = $region12
    $region11: #{conv_layer_forward.2} parent=5 // pred_region
      %s150 = ssub.s32 %s11, 1
      // Predicated region
      $region13: #{conv_layer_forward.2} parent=11 // pred_check
        %p151 = pneg %p58
      $region14: #{conv_layer_forward.2} parent=11 // pred_check_branch
        %153 = sbr.rel (%p151) target = $region16
      $region15: #{conv_layer_forward.2} parent=11 // pred_region
        _
      $region16: #{conv_layer_forward.2} parent=11 // pred_fallthru
        _
    $region12: #{conv_layer_forward.2} parent=5 // pred_fallthru
      _
    %p154 = scmp.lt.s32.totalorder %s11, 2
    // Predicated region
    $region17: #{conv_layer_forward.2} parent=5 // pred_check
      %p155 = pneg %p154
    $region18: #{conv_layer_forward.2} parent=5 // pred_check_branch
      %157 = sbr.rel (%p155) target = $region20
    $region19: #{conv_layer_forward.2} parent=5 // pred_region
      // Predicated region
      $region21: #{conv_layer_forward.2} parent=19 // pred_check
        %p158 = pneg %p31
      $region22: #{conv_layer_forward.2} parent=19 // pred_check_branch
        %160 = sbr.rel (%p158) target = $region24
      $region23: #{conv_layer_forward.2} parent=19 // pred_region
        %p161 = scmp.lt.s32.totalorder %s11, 1
        %s162 = scalar_select %p161, %s11, 1
        %s163 = smul.addr %s162, 2
        %s164 = smul.addr %s163, 8
        %s165 = scalar_lea.vmem %s0, %s164
      $region24: #{conv_layer_forward.2} parent=19 // pred_fallthru
        _
    $region20: #{conv_layer_forward.2} parent=5 // pred_fallthru
      _
    %p166 = scmp.le.s32.totalorder 1, %s11
    %p167 = scmp.lt.s32.totalorder %s11, 3
    %p168 = pnand %p166, %p167
    %p169 = pneg %p168
    // Predicated region
    $region25: #{conv_layer_forward.2} parent=5 // pred_check
      _
    $region26: #{conv_layer_forward.2} parent=5 // pred_check_branch
      %171 = sbr.rel (%p168) target = $region28
    $region27: #{conv_layer_forward.2} parent=5 // pred_region
      %s172 = ssub.s32 %s11, 1
      %p173 = scmp.lt.s32.totalorder %s16, 1
      %s174 = scalar_select %p173, %s16, 1
      %s175 = smul.addr %s174, 2
      %s176 = smul.addr %s175, 8
      %s177 = scalar_lea.vmem %s0, %s176
      %p178 = pneg %p37
      %p179 = pneg %p34
      %p180 = pneg %p58
      %p181 = pneg %p55
      %p182 = pneg %p84
      %p183 = pneg %p81
      %p184 = scmp.lt.s32.totalorder %s16, 1
      %s185 = scalar_select %p184, %s16, 1
      %s186 = smul.addr %s185, 2
      %s187 = smul.addr %s186, 8
      %s188 = scalar_lea.vmem %s2, %s187
      %p189 = pneg %p110
      %p190 = pneg %p107
      %p191 = scmp.lt.s32.totalorder %s16, 1
      %s192 = scalar_select %p191, %s16, 1
      %s193 = scalar_lea.vmem %s3, %s192
      %p194 = pneg %p136
      %p195 = pneg %p133
      %p196 = scmp.lt.s32.totalorder %s16, 1
      %s197 = scalar_select %p196, %s16, 1
      %s198 = scalar_lea.vmem %s4, %s197
      %p199 = scmp.lt.s32.totalorder %s16, 1
      %s200 = scalar_select %p199, %s16, 1
      %s201 = smul.addr %s200, 2
      %s202 = smul.addr %s201, 8
      %s203 = scalar_lea.vmem %s0, %s202
      %p204 = scmp.lt.s32.totalorder %s16, 1
      %s205 = scalar_select %p204, %s16, 1
      %s206 = smul.addr %s205, 2
      %s207 = smul.addr %s206, 8
      %s208 = scalar_lea.vmem %s2, %s207
      %p209 = scmp.lt.s32.totalorder %s16, 1
      %s210 = scalar_select %p209, %s16, 1
      %s211 = scalar_lea.vmem %s3, %s210
      %p212 = scmp.lt.s32.totalorder %s16, 1
      %s213 = scalar_select %p212, %s16, 1
      %s214 = scalar_lea.vmem %s4, %s213
      %v216 = vld [vmem:[%s203] sm:$0xff]
      %v217 = vld [vmem:[%s203 + $0x8] sm:$0xff]
      %v219 = vrot.slane %v217, 7
      %vm222 = vcmask 1040384
      %v223 = vrot.slane %v216, 7
      %v224 = vsel %vm222, %v223, %v219
      %v227 = vsel %vm222, %v219, %v223
      %v228 = vpack.c.bf16 %v224, %v227
      %v229 = vld [vmem:[%s1] sm:$0xf]
      %v230 = vld [vmem:[%s1 + $0x4] sm:$0xf]
      %v231 = vld [vmem:[%s1 + $0x8] sm:$0xf]
      %v232 = vld [vmem:[%s1 + $0xc] sm:$0xf]
      %v233 = vld [vmem:[%s1 + $0x10] sm:$0xf]
      %v234 = vld [vmem:[%s1 + $0x14] sm:$0xf]
      %v235 = vld [vmem:[%s1 + $0x18] sm:$0xf]
      %v236 = vld [vmem:[%s1 + $0x1c] sm:$0xf]
      %v237 = vpack.c.bf16 %v217, %v216
      %s238 = scalar_lea.vmem %s1, 32
      %v239 = vld [vmem:[%s238] sm:$0xf]
      %v240 = vld [vmem:[%s238 + $0x4] sm:$0xf]
      %v241 = vld [vmem:[%s238 + $0x8] sm:$0xf]
      %v242 = vld [vmem:[%s238 + $0xc] sm:$0xf]
      %v243 = vld [vmem:[%s238 + $0x10] sm:$0xf]
      %v244 = vld [vmem:[%s238 + $0x14] sm:$0xf]
      %v245 = vld [vmem:[%s238 + $0x18] sm:$0xf]
      %v246 = vld [vmem:[%s238 + $0x1c] sm:$0xf]
      %v255 = vunpack.c.l.b16 %v239
      %v256 = vunpack.c.l.b16 %v240
      %v257 = vunpack.c.l.b16 %v241
      %v258 = vunpack.c.l.b16 %v242
      %v259 = vunpack.c.l.b16 %v243
      %v260 = vunpack.c.l.b16 %v244
      %v261 = vunpack.c.l.b16 %v245
      %v262 = vunpack.c.l.b16 %v246
      %v263 = vpack.c.b16 %v256, %v255
      %v264 = vpack.c.b16 %v258, %v257
      %v265 = vpack.c.b16 %v260, %v259
      %v266 = vpack.c.b16 %v262, %v261
      %vm271 = vcmask 523264
      %v273 = vsel %vm271, %v237, 0
      %275 = vmatpush.bf16.msra.mxu0 0
      %276 = vmatpush.bf16.msra.mxu0 0
      %277 = vmatpush.bf16.msra.mxu0 0
      %278 = vmatpush.bf16.msra.mxu0 0
      %279 = vmatpush.bf16.msra.mxu0 %v266
      %280 = vmatpush.bf16.msra.mxu0 %v265
      %281 = vmatpush.bf16.msra.mxu0 %v264
      %282 = vmatpush.bf16.msra.mxu0 %v263
      %283 = vmatmul.bf16.gmra.mxu0 %v273
      %v284 = vpop.f32.mrf.mxu0
      %v285 = vadd.f32 0.0, %v284
      %v286 = vpop.f32.mrf.mxu0
      %v287 = vadd.f32 0.0, %v286
      %288 = vdwg.mxu0
      %v297 = vunpack.c.l.b16 %v229
      %v298 = vunpack.c.l.b16 %v230
      %v299 = vunpack.c.l.b16 %v231
      %v300 = vunpack.c.l.b16 %v232
      %v301 = vunpack.c.l.b16 %v233
      %v302 = vunpack.c.l.b16 %v234
      %v303 = vunpack.c.l.b16 %v235
      %v304 = vunpack.c.l.b16 %v236
      %v305 = vpack.c.b16 %v298, %v297
      %v306 = vpack.c.b16 %v300, %v299
      %v307 = vpack.c.b16 %v302, %v301
      %v308 = vpack.c.b16 %v304, %v303
      %v314 = vsel %vm271, %v228, 0
      %316 = vmatpush.bf16.msra.mxu0 0
      %317 = vmatpush.bf16.msra.mxu0 0
      %318 = vmatpush.bf16.msra.mxu0 0
      %319 = vmatpush.bf16.msra.mxu0 0
      %320 = vmatpush.bf16.msra.mxu0 %v308
      %321 = vmatpush.bf16.msra.mxu0 %v307
      %322 = vmatpush.bf16.msra.mxu0 %v306
      %323 = vmatpush.bf16.msra.mxu0 %v305
      %324 = vmatmul.bf16.gmra.mxu0 %v314
      %v325 = vpop.f32.mrf.mxu0
      %v326 = vadd.f32 %v285, %v325
      %v327 = vpop.f32.mrf.mxu0
      %v328 = vadd.f32 %v287, %v327
      %329 = vdwg.mxu0
      %vm330 = vcmask 1046528
      %v331 = vrot.slane %v216, 1
      %v332 = vrot.slane %v217, 1
      %v333 = vsel %vm330, %v331, %v332
      %v337 = vsel %vm330, %v332, %v331
      %v338 = vpack.c.bf16 %v337, %v333
      %s339 = scalar_lea.vmem %s1, 64
      %v340 = vld [vmem:[%s339] sm:$0xf]
      %v341 = vld [vmem:[%s339 + $0x4] sm:$0xf]
      %v342 = vld [vmem:[%s339 + $0x8] sm:$0xf]
      %v343 = vld [vmem:[%s339 + $0xc] sm:$0xf]
      %v344 = vld [vmem:[%s339 + $0x10] sm:$0xf]
      %v345 = vld [vmem:[%s339 + $0x14] sm:$0xf]
      %v346 = vld [vmem:[%s339 + $0x18] sm:$0xf]
      %v347 = vld [vmem:[%s339 + $0x1c] sm:$0xf]
      %v356 = vunpack.c.l.b16 %v340
      %v357 = vunpack.c.l.b16 %v341
      %v358 = vunpack.c.l.b16 %v342
      %v359 = vunpack.c.l.b16 %v343
      %v360 = vunpack.c.l.b16 %v344
      %v361 = vunpack.c.l.b16 %v345
      %v362 = vunpack.c.l.b16 %v346
      %v363 = vunpack.c.l.b16 %v347
      %v364 = vpack.c.b16 %v357, %v356
      %v365 = vpack.c.b16 %v359, %v358
      %v366 = vpack.c.b16 %v361, %v360
      %v367 = vpack.c.b16 %v363, %v362
      %v373 = vsel %vm271, %v338, 0
      %375 = vmatpush.bf16.msra.mxu0 0
      %376 = vmatpush.bf16.msra.mxu0 0
      %377 = vmatpush.bf16.msra.mxu0 0
      %378 = vmatpush.bf16.msra.mxu0 0
      %379 = vmatpush.bf16.msra.mxu0 %v367
      %380 = vmatpush.bf16.msra.mxu0 %v366
      %381 = vmatpush.bf16.msra.mxu0 %v365
      %382 = vmatpush.bf16.msra.mxu0 %v364
      %383 = vmatmul.bf16.gmra.mxu0 %v373
      %v384 = vpop.f32.mrf.mxu0
      %v385 = vadd.f32 0.0, %v384
      %v386 = vpop.f32.mrf.mxu0
      %v387 = vadd.f32 0.0, %v386
      %388 = vdwg.mxu0
      %v389 = vadd.f32 %v326, %v385
      %v390 = vadd.f32 %v328, %v387
      %391 = vst [vmem:[%s208] sm:$0xff] %v389
      %392 = vst [vmem:[%s208 + $0x8] sm:$0xff] %v390
      %v393 = vadd.f32 %v389, %v390
      %v394 = vrot.slane %v393, 4
      %v395 = vadd.f32 %v393, %v394
      %v396 = vrot.slane %v395, 2
      %v397 = vadd.f32 %v395, %v396
      %v398 = vrot.slane %v397, 1
      %v399 = vadd.f32 %v397, %v398
      %400 = vst [vmem:[%s211] sm:$0x1] %v399
      %v401 = vmul.f32 %v389, %v389
      %v402 = vmul.f32 %v390, %v390
      %v403 = vadd.f32 %v401, %v402
      %v404 = vrot.slane %v403, 4
      %v405 = vadd.f32 %v403, %v404
      %v406 = vrot.slane %v405, 2
      %v407 = vadd.f32 %v405, %v406
      %v408 = vrot.slane %v407, 1
      %v409 = vadd.f32 %v407, %v408
      %410 = vst [vmem:[%s214] sm:$0x1] %v409
      %p411 = scmp.lt.s32.totalorder %s16, 1
      %s412 = scalar_select %p411, %s16, 1
      %s413 = smul.addr %s412, 2
      %s414 = smul.addr %s413, 8
      %s415 = scalar_lea.vmem %s2, %s414
      %p416 = scmp.lt.s32.totalorder %s16, 1
      %s417 = scalar_select %p416, %s16, 1
      %s418 = scalar_lea.vmem %s3, %s417
      %p419 = scmp.lt.s32.totalorder %s16, 1
      %s420 = scalar_select %p419, %s16, 1
      %s421 = scalar_lea.vmem %s4, %s420
      // Predicated region
      $region29: #{conv_layer_forward.2} parent=27 // pred_check
        %p422 = pneg %p81
      $region30: #{conv_layer_forward.2} parent=27 // pred_check_branch
        %424 = sbr.rel (%p422) target = $region32
      $region31: #{conv_layer_forward.2} parent=27 // pred_region
        _
      $region32: #{conv_layer_forward.2} parent=27 // pred_fallthru
        _
      // Predicated region
      $region33: #{conv_layer_forward.2} parent=27 // pred_check
        %p425 = pneg %p107
      $region34: #{conv_layer_forward.2} parent=27 // pred_check_branch
        %427 = sbr.rel (%p425) target = $region36
      $region35: #{conv_layer_forward.2} parent=27 // pred_region
        _
      $region36: #{conv_layer_forward.2} parent=27 // pred_fallthru
        _
      // Predicated region
      $region37: #{conv_layer_forward.2} parent=27 // pred_check
        %p428 = pneg %p133
      $region38: #{conv_layer_forward.2} parent=27 // pred_check_branch
        %430 = sbr.rel (%p428) target = $region40
      $region39: #{conv_layer_forward.2} parent=27 // pred_region
        _
      $region40: #{conv_layer_forward.2} parent=27 // pred_fallthru
        _
    $region28: #{conv_layer_forward.2} parent=5 // pred_fallthru
      _
    %p431 = scmp.le.s32.totalorder 2, %s11
    // Predicated region
    $region41: #{conv_layer_forward.2} parent=5 // pred_check
      %p432 = pneg %p431
    $region42: #{conv_layer_forward.2} parent=5 // pred_check_branch
      %434 = sbr.rel (%p432) target = $region44
    $region43: #{conv_layer_forward.2} parent=5 // pred_region
      %s435 = ssub.s32 %s11, 2
      // Predicated region
      $region45: #{conv_layer_forward.2} parent=43 // pred_check
        %p436 = pneg %p87
      $region46: #{conv_layer_forward.2} parent=43 // pred_check_branch
        %438 = sbr.rel (%p436) target = $region48
      $region47: #{conv_layer_forward.2} parent=43 // pred_region
        %p439 = scmp.lt.s32.totalorder %s17, 1
        %s440 = scalar_select %p439, %s17, 1
        %s441 = smul.addr %s440, 2
        %s442 = smul.addr %s441, 8
        %s443 = scalar_lea.vmem %s2, %s442
      $region48: #{conv_layer_forward.2} parent=43 // pred_fallthru
        _
      // Predicated region
      $region49: #{conv_layer_forward.2} parent=43 // pred_check
        %p444 = pneg %p113
      $region50: #{conv_layer_forward.2} parent=43 // pred_check_branch
        %446 = sbr.rel (%p444) target = $region52
      $region51: #{conv_layer_forward.2} parent=43 // pred_region
        %p447 = scmp.lt.s32.totalorder %s17, 1
        %s448 = scalar_select %p447, %s17, 1
        %s449 = scalar_lea.vmem %s3, %s448
      $region52: #{conv_layer_forward.2} parent=43 // pred_fallthru
        _
      // Predicated region
      $region53: #{conv_layer_forward.2} parent=43 // pred_check
        %p450 = pneg %p139
      $region54: #{conv_layer_forward.2} parent=43 // pred_check_branch
        %452 = sbr.rel (%p450) target = $region56
      $region55: #{conv_layer_forward.2} parent=43 // pred_region
        %p453 = scmp.lt.s32.totalorder %s17, 1
        %s454 = scalar_select %p453, %s17, 1
        %s455 = scalar_lea.vmem %s4, %s454
      $region56: #{conv_layer_forward.2} parent=43 // pred_fallthru
        _
    $region44: #{conv_layer_forward.2} parent=5 // pred_fallthru
      _
  $region6: #{conv_layer_forward.2} parent=0 // loop_footer
    %s15 = sadd.s32 1, %s11
  $region7: #{conv_layer_forward.2} parent=0 // loop_footer_branch
    %10 = sbr.rel target = $region3
  $region8: #{conv_layer_forward.2} parent=0 // loop_exit
    _

// kernel: tile.13
$region0: #{tile.13}
  #allocation0 [shape = 's32[1]{0}', space=sflag, size = 0x4, scoped, tag = 'scoped memory for tile.13']
  %s0 = inlined_call_operand.vmem [shape: f32[8], index: 0, kind: input, shape index: {}]
  %s1 = inlined_call_operand.vmem [shape: f32[16,8], index: 1, kind: output, shape index: {}]
  // Predicated region
  $region2: #{tile.13} parent=0 // pred_check
    _
  $region3: #{tile.13} parent=0 // pred_check_branch
    %3 = sbr.rel (0) target = $region5
  $region4: #{tile.13} parent=0 // pred_region
    _
  $region5: #{tile.13} parent=0 // pred_fallthru
    _
  %v4 = vld [vmem:[%s0] ss:$0 sm:$0xff]
  %5 = vst [vmem:[%s1] sm:$0xff] %v4
  %s6 = scalar_lea.vmem %s1, 8
  %7 = vst [vmem:[%s6] sm:$0xff] %v4

// kernel: tile.14
$region0: #{tile.14}
  %s0 = inlined_call_operand.vmem [shape: f32[16,8], index: 0, kind: input, shape index: {}]
  %s1 = inlined_call_operand.vmem [shape: f32[1,128], index: 1, kind: output, shape index: {}]
  $region1: #{tile.14} parent=0
    #allocation0 [shape = 'u8[4096]{0}', space=vmem, size = 0x1000, scoped, tag = 'scoped mem for output reshape']
    %v2 = vld [vmem:[%s0] sm:$0x1]
    %vm3 = vcmask 64512
    %4 = vst.msk [vmem:[#allocation0] sm:$0x1] %vm3, %v2
    %s5 = scalar_lea.vmem %s0, 15
    %v6 = vld [vmem:[%s5] sm:$0x1]
    %7 = vrot.lane.b32.xlu0 %v6, 120
    %v8 = vpop.permute.xlu0 %7
    %vm9 = vcmask 1048512
    %10 = vst.msk [vmem:[#allocation0] sm:$0x1] %vm9, %v8
    %s11 = scalar_lea.vmem %s0, 14
    %v12 = vld [vmem:[%s11] sm:$0x1]
    %13 = vrot.lane.b32.xlu0 %v12, 112
    %v14 = vpop.permute.xlu0 %13
    %vm15 = vcmask 982912
    %16 = vst.msk [vmem:[#allocation0] sm:$0x1] %vm15, %v14
    %s17 = scalar_lea.vmem %s0, 13
    %v18 = vld [vmem:[%s17] sm:$0x1]
    %19 = vrot.lane.b32.xlu0 %v18, 104
    %v20 = vpop.permute.xlu0 %19
    %vm21 = vcmask 917312
    %22 = vst.msk [vmem:[#allocation0] sm:$0x1] %vm21, %v20
    %s23 = scalar_lea.vmem %s0, 12
    %v24 = vld [vmem:[%s23] sm:$0x1]
    %25 = vrot.lane.b32.xlu0 %v24, 96
    %v26 = vpop.permute.xlu0 %25
    %vm27 = vcmask 851712
    %28 = vst.msk [vmem:[#allocation0] sm:$0x1] %vm27, %v26
    %s29 = scalar_lea.vmem %s0, 11
    %v30 = vld [vmem:[%s29] sm:$0x1]
    %31 = vrot.lane.b32.xlu0 %v30, 88
    %v32 = vpop.permute.xlu0 %31
    %vm33 = vcmask 786112
    %34 = vst.msk [vmem:[#allocation0] sm:$0x1] %vm33, %v32
    %s35 = scalar_lea.vmem %s0, 10
    %v36 = vld [vmem:[%s35] sm:$0x1]
    %37 = vrot.lane.b32.xlu0 %v36, 80
    %v38 = vpop.permute.xlu0 %37
    %vm39 = vcmask 720512
    %40 = vst.msk [vmem:[#allocation0] sm:$0x1] %vm39, %v38
    %s41 = scalar_lea.vmem %s0, 9
    %v42 = vld [vmem:[%s41] sm:$0x1]
    %43 = vrot.lane.b32.xlu0 %v42, 72
    %v44 = vpop.permute.xlu0 %43
    %vm45 = vcmask 654912
    %46 = vst.msk [vmem:[#allocation0] sm:$0x1] %vm45, %v44
    %s47 = scalar_lea.vmem %s0, 8
    %v48 = vld [vmem:[%s47] sm:$0x1]
    %49 = vrot.lane.b32.xlu0 %v48, 64
    %v50 = vpop.permute.xlu0 %49
    %vm51 = vcmask 589312
    %52 = vst.msk [vmem:[#allocation0] sm:$0x1] %vm51, %v50
    %s53 = scalar_lea.vmem %s0, 7
    %v54 = vld [vmem:[%s53] sm:$0x1]
    %55 = vrot.lane.b32.xlu0 %v54, 56
    %v56 = vpop.permute.xlu0 %55
    %vm57 = vcmask 523712
    %58 = vst.msk [vmem:[#allocation0] sm:$0x1] %vm57, %v56
    %s59 = scalar_lea.vmem %s0, 6
    %v60 = vld [vmem:[%s59] sm:$0x1]
    %61 = vrot.lane.b32.xlu0 %v60, 48
    %v62 = vpop.permute.xlu0 %61
    %vm63 = vcmask 458112
    %64 = vst.msk [vmem:[#allocation0] sm:$0x1] %vm63, %v62
    %s65 = scalar_lea.vmem %s0, 5
    %v66 = vld [vmem:[%s65] sm:$0x1]
    %67 = vrot.lane.b32.xlu0 %v66, 40
    %v68 = vpop.permute.xlu0 %67
    %vm69 = vcmask 392512
    %70 = vst.msk [vmem:[#allocation0] sm:$0x1] %vm69, %v68
    %s71 = scalar_lea.vmem %s0, 4
    %v72 = vld [vmem:[%s71] sm:$0x1]
    %73 = vrot.lane.b32.xlu0 %v72, 32
    %v74 = vpop.permute.xlu0 %73
    %vm75 = vcmask 326912
    %76 = vst.msk [vmem:[#allocation0] sm:$0x1] %vm75, %v74
    %s77 = scalar_lea.vmem %s0, 3
    %v78 = vld [vmem:[%s77] sm:$0x1]
    %79 = vrot.lane.b32.xlu0 %v78, 24
    %v80 = vpop.permute.xlu0 %79
    %vm81 = vcmask 261312
    %82 = vst.msk [vmem:[#allocation0] sm:$0x1] %vm81, %v80
    %s83 = scalar_lea.vmem %s0, 2
    %v84 = vld [vmem:[%s83] sm:$0x1]
    %85 = vrot.lane.b32.xlu0 %v84, 16
    %v86 = vpop.permute.xlu0 %85
    %vm87 = vcmask 195712
    %88 = vst.msk [vmem:[#allocation0] sm:$0x1] %vm87, %v86
    %s89 = scalar_lea.vmem %s0, 1
    %v90 = vld [vmem:[%s89] sm:$0x1]
    %91 = vrot.lane.b32.xlu0 %v90, 8
    %v92 = vpop.permute.xlu0 %91
    %vm93 = vcmask 130112
    %94 = vst.msk [vmem:[#allocation0] sm:$0x1] %vm93, %v92
    %s96 = ssub.s32 2, 1
    %v97 = vld [vmem:[#allocation0] sm:%s96]
    %s99 = ssub.s32 2, 1
    %100 = vst [vmem:[%s1] sm:%s99] %v97

// kernel: conv_layer_forward.3
$region0: #{conv_layer_forward.3}
  #allocation0 [shape = 'u32[]', space=smem, size = 0x4, offset = 0x4, fixed_abs, tag = 'smem constant byte address 0x4 - core index']
  #allocation1 [shape = 'u32[72,128]{1,0:T(1,128)}', space=vmem, size = 0x9000, scoped, tag = 'internal scratch']
  %s0 = inlined_call_operand.vmem [shape: f32[2,16,128], index: 0, kind: input, shape index: {}]
  %s1 = inlined_call_operand.vmem [shape: f32[1,128], index: 1, kind: input, shape index: {}]
  %s2 = inlined_call_operand.vmem [shape: f32[1,128], index: 2, kind: input, shape index: {}]
  %s3 = inlined_call_operand.vmem [shape: f32[2,16,128], index: 3, kind: output, shape index: {}]
  %s4 = sld [smem:[#allocation0]]
  $region45: #{conv_layer_forward.3} parent=0
    _
  %s6 = ssub.s32 1, %s4
  %s7 = scalar_select 0, %s6, %s4
  loop: start=0, step=1, limit=4
  $region2: #{conv_layer_forward.3} parent=0 // loop_pre_header
    _
  $region3: #{conv_layer_forward.3} parent=0 // loop_header
    %s9 = sphi 0, %s13
    %p10 = scmp.ge.s32.totalorder %s9, 4
    %s19 = sphi 0, %s21
    %s22 = sphi 0, %s19
    %s23 = sphi 0, %s22
    %s39 = sphi 0, %s23
    %s43 = sphi 0, %s43
    %s45 = sphi 0, %s43
    %s46 = sphi 0, %s45
    %s60 = sphi 0, %s46
    %s64 = sphi 0, %s64
    %s66 = sphi 0, %s64
    %s67 = sphi 0, %s66
    %s81 = sphi 0, %s67
    %s87 = sphi 0, %s89
    %s90 = sphi 0, %s87
    %s91 = sphi 0, %s90
    %s107 = sphi 0, %s91
  $region4: #{conv_layer_forward.3} parent=0 // loop_header_branch
    %12 = sbr.rel (%p10) target = $region8
  $region5: #{conv_layer_forward.3} parent=0 // loop_body
    %s14 = ssub.s32 %s9, 1
    %s15 = ssub.s32 %s9, 2
    %s16 = sadd.s32 %s9, 1
    %s17 = ssub.s32 %s9, %s16
    %p18 = scmp.eq.s32.totalorder %s17, 0
    %s20 = sadd.s32 %s19, 1
    %s21 = scalar_select %p18, %s19, %s20
    %p24 = pneg %p18
    %p25 = scmp.eq.s32.totalorder %s9, 1
    %p26 = por %p24, %p25
    %p27 = scmp.ne.s32.totalorder %s19, %s22
    %p28 = scmp.eq.s32.totalorder %s9, 0
    %p29 = por %p27, %p28
    %p30 = scmp.ne.s32.totalorder %s19, %s22
    %p31 = scmp.eq.s32.totalorder %s14, 1
    %p32 = por %p30, %p31
    %p33 = scmp.ne.s32.totalorder %s22, %s23
    %p34 = scmp.eq.s32.totalorder %s14, 0
    %p35 = por %p33, %p34
    %p36 = scmp.ne.s32.totalorder %s22, %s23
    %p37 = scmp.eq.s32.totalorder %s15, 1
    %p38 = por %p36, %p37
    %p40 = scmp.ne.s32.totalorder %s23, %s39
    %p41 = scmp.eq.s32.totalorder %s15, 0
    %p42 = por %p40, %p41
    %s44 = sadd.s32 %s43, 1
    %p47 = scmp.eq.s32.totalorder %s9, 1
    %p48 = scmp.ne.s32.totalorder %s43, %s45
    %p49 = scmp.eq.s32.totalorder %s9, 0
    %p50 = por %p48, %p49
    %p51 = scmp.ne.s32.totalorder %s43, %s45
    %p52 = scmp.eq.s32.totalorder %s14, 1
    %p53 = por %p51, %p52
    %p54 = scmp.ne.s32.totalorder %s45, %s46
    %p55 = scmp.eq.s32.totalorder %s14, 0
    %p56 = por %p54, %p55
    %p57 = scmp.ne.s32.totalorder %s45, %s46
    %p58 = scmp.eq.s32.totalorder %s15, 1
    %p59 = por %p57, %p58
    %p61 = scmp.ne.s32.totalorder %s46, %s60
    %p62 = scmp.eq.s32.totalorder %s15, 0
    %p63 = por %p61, %p62
    %s65 = sadd.s32 %s64, 1
    %p68 = scmp.eq.s32.totalorder %s9, 1
    %p69 = scmp.ne.s32.totalorder %s64, %s66
    %p70 = scmp.eq.s32.totalorder %s9, 0
    %p71 = por %p69, %p70
    %p72 = scmp.ne.s32.totalorder %s64, %s66
    %p73 = scmp.eq.s32.totalorder %s14, 1
    %p74 = por %p72, %p73
    %p75 = scmp.ne.s32.totalorder %s66, %s67
    %p76 = scmp.eq.s32.totalorder %s14, 0
    %p77 = por %p75, %p76
    %p78 = scmp.ne.s32.totalorder %s66, %s67
    %p79 = scmp.eq.s32.totalorder %s15, 1
    %p80 = por %p78, %p79
    %p82 = scmp.ne.s32.totalorder %s67, %s81
    %p83 = scmp.eq.s32.totalorder %s15, 0
    %p84 = por %p82, %p83
    %s85 = ssub.s32 %s9, %s16
    %p86 = scmp.eq.s32.totalorder %s85, 0
    %s88 = sadd.s32 %s87, 1
    %s89 = scalar_select %p86, %s87, %s88
    %p92 = pneg %p86
    %p93 = scmp.eq.s32.totalorder %s9, 1
    %p94 = por %p92, %p93
    %p95 = scmp.ne.s32.totalorder %s87, %s90
    %p96 = scmp.eq.s32.totalorder %s9, 0
    %p97 = por %p95, %p96
    %p98 = scmp.ne.s32.totalorder %s87, %s90
    %p99 = scmp.eq.s32.totalorder %s14, 1
    %p100 = por %p98, %p99
    %p101 = scmp.ne.s32.totalorder %s90, %s91
    %p102 = scmp.eq.s32.totalorder %s14, 0
    %p103 = por %p101, %p102
    %p104 = scmp.ne.s32.totalorder %s90, %s91
    %p105 = scmp.eq.s32.totalorder %s15, 1
    %p106 = por %p104, %p105
    %p108 = scmp.ne.s32.totalorder %s91, %s107
    %p109 = scmp.eq.s32.totalorder %s15, 0
    %p110 = por %p108, %p109
    %p111 = scmp.le.s32.totalorder 1, %s9
    %p112 = scmp.lt.s32.totalorder %s9, 3
    %p113 = pnand %p111, %p112
    %p114 = pneg %p113
    // Predicated region
    $region9: #{conv_layer_forward.3} parent=5 // pred_check
      _
    $region10: #{conv_layer_forward.3} parent=5 // pred_check_branch
      %116 = sbr.rel (%p113) target = $region12
    $region11: #{conv_layer_forward.3} parent=5 // pred_region
      %s117 = ssub.s32 %s9, 1
      // Predicated region
      $region13: #{conv_layer_forward.3} parent=11 // pred_check
        %p118 = pneg %p56
      $region14: #{conv_layer_forward.3} parent=11 // pred_check_branch
        %120 = sbr.rel (%p118) target = $region16
      $region15: #{conv_layer_forward.3} parent=11 // pred_region
        _
      $region16: #{conv_layer_forward.3} parent=11 // pred_fallthru
        _
      // Predicated region
      $region17: #{conv_layer_forward.3} parent=11 // pred_check
        %p121 = pneg %p77
      $region18: #{conv_layer_forward.3} parent=11 // pred_check_branch
        %123 = sbr.rel (%p121) target = $region20
      $region19: #{conv_layer_forward.3} parent=11 // pred_region
        _
      $region20: #{conv_layer_forward.3} parent=11 // pred_fallthru
        _
    $region12: #{conv_layer_forward.3} parent=5 // pred_fallthru
      _
    %p124 = scmp.lt.s32.totalorder %s9, 2
    // Predicated region
    $region21: #{conv_layer_forward.3} parent=5 // pred_check
      %p125 = pneg %p124
    $region22: #{conv_layer_forward.3} parent=5 // pred_check_branch
      %127 = sbr.rel (%p125) target = $region24
    $region23: #{conv_layer_forward.3} parent=5 // pred_region
      // Predicated region
      $region25: #{conv_layer_forward.3} parent=23 // pred_check
        %p128 = pneg %p29
      $region26: #{conv_layer_forward.3} parent=23 // pred_check_branch
        %130 = sbr.rel (%p128) target = $region28
      $region27: #{conv_layer_forward.3} parent=23 // pred_region
        %p131 = scmp.lt.s32.totalorder %s9, 1
        %s132 = scalar_select %p131, %s9, 1
        %s133 = smul.addr %s132, 2
        %s134 = smul.addr %s133, 8
        %s135 = scalar_lea.vmem %s0, %s134
      $region28: #{conv_layer_forward.3} parent=23 // pred_fallthru
        _
    $region24: #{conv_layer_forward.3} parent=5 // pred_fallthru
      _
    %p136 = scmp.le.s32.totalorder 1, %s9
    %p137 = scmp.lt.s32.totalorder %s9, 3
    %p138 = pnand %p136, %p137
    %p139 = pneg %p138
    // Predicated region
    $region29: #{conv_layer_forward.3} parent=5 // pred_check
      _
    $region30: #{conv_layer_forward.3} parent=5 // pred_check_branch
      %141 = sbr.rel (%p138) target = $region32
    $region31: #{conv_layer_forward.3} parent=5 // pred_region
      %s142 = ssub.s32 %s9, 1
      %p143 = scmp.lt.s32.totalorder %s14, 1
      %s144 = scalar_select %p143, %s14, 1
      %s145 = smul.addr %s144, 2
      %s146 = smul.addr %s145, 8
      %s147 = scalar_lea.vmem %s0, %s146
      %p148 = pneg %p35
      %p149 = pneg %p32
      %p150 = pneg %p56
      %p151 = pneg %p53
      %p152 = pneg %p77
      %p153 = pneg %p74
      %p154 = pneg %p103
      %p155 = pneg %p100
      %p156 = scmp.lt.s32.totalorder %s14, 1
      %s157 = scalar_select %p156, %s14, 1
      %s158 = smul.addr %s157, 2
      %s159 = smul.addr %s158, 8
      %s160 = scalar_lea.vmem %s3, %s159
      %p161 = scmp.lt.s32.totalorder %s14, 1
      %s162 = scalar_select %p161, %s14, 1
      %s163 = smul.addr %s162, 2
      %s164 = smul.addr %s163, 8
      %s165 = scalar_lea.vmem %s0, %s164
      %p166 = scmp.lt.s32.totalorder %s14, 1
      %s167 = scalar_select %p166, %s14, 1
      %s168 = smul.addr %s167, 2
      %s169 = smul.addr %s168, 8
      %s170 = scalar_lea.vmem %s3, %s169
      %v171 = vld [vmem:[%s165] sm:$0xff]
      %v172 = vld [vmem:[%s165 + $0x8] sm:$0xff]
      %v173 = vld [vmem:[%s1] sm:$0x1]
      %v175 = vperm.slane %v173, 0
      %v177 = vmul.f32 %v171, %v175
      %v178 = vmul.f32 %v172, %v175
      %v179 = vld [vmem:[%s2] sm:$0x1]
      %v181 = vperm.slane %v179, 0
      %v183 = vadd.f32 %v177, %v181
      %v184 = vadd.f32 %v178, %v181
      %v185 = vmax.f32 %v183, 0.0
      %v186 = vmax.f32 %v184, 0.0
      %187 = vst [vmem:[%s170] sm:$0xff] %v185
      %188 = vst [vmem:[%s170 + $0x8] sm:$0xff] %v186
      %p189 = scmp.lt.s32.totalorder %s14, 1
      %s190 = scalar_select %p189, %s14, 1
      %s191 = smul.addr %s190, 2
      %s192 = smul.addr %s191, 8
      %s193 = scalar_lea.vmem %s3, %s192
      // Predicated region
      $region33: #{conv_layer_forward.3} parent=31 // pred_check
        %p194 = pneg %p100
      $region34: #{conv_layer_forward.3} parent=31 // pred_check_branch
        %196 = sbr.rel (%p194) target = $region36
      $region35: #{conv_layer_forward.3} parent=31 // pred_region
        _
      $region36: #{conv_layer_forward.3} parent=31 // pred_fallthru
        _
    $region32: #{conv_layer_forward.3} parent=5 // pred_fallthru
      _
    %p197 = scmp.le.s32.totalorder 2, %s9
    // Predicated region
    $region37: #{conv_layer_forward.3} parent=5 // pred_check
      %p198 = pneg %p197
    $region38: #{conv_layer_forward.3} parent=5 // pred_check_branch
      %200 = sbr.rel (%p198) target = $region40
    $region39: #{conv_layer_forward.3} parent=5 // pred_region
      %s201 = ssub.s32 %s9, 2
      // Predicated region
      $region41: #{conv_layer_forward.3} parent=39 // pred_check
        %p202 = pneg %p106
      $region42: #{conv_layer_forward.3} parent=39 // pred_check_branch
        %204 = sbr.rel (%p202) target = $region44
      $region43: #{conv_layer_forward.3} parent=39 // pred_region
        %p205 = scmp.lt.s32.totalorder %s15, 1
        %s206 = scalar_select %p205, %s15, 1
        %s207 = smul.addr %s206, 2
        %s208 = smul.addr %s207, 8
        %s209 = scalar_lea.vmem %s3, %s208
      $region44: #{conv_layer_forward.3} parent=39 // pred_fallthru
        _
    $region40: #{conv_layer_forward.3} parent=5 // pred_fallthru
      _
  $region6: #{conv_layer_forward.3} parent=0 // loop_footer
    %s13 = sadd.s32 1, %s9
  $region7: #{conv_layer_forward.3} parent=0 // loop_footer_branch
    %8 = sbr.rel target = $region3
  $region8: #{conv_layer_forward.3} parent=0 // loop_exit
    _

</llo_original>
